<compile_context>
chip_gen: v6e
topology: v6e:2x2x1
jax: 0.10.0
libtpu: 0.0.40
codegen_flags: <defaults>
</compile_context>

<pallas_src>
import functools

import jax
import jax.numpy as jnp
from jax.experimental import pallas as pl
from jax.experimental.pallas import tpu as pltpu


def _round_up(x, m):
    return ((x + m - 1) // m) * m


def _cdiv(a, b):
    return -(-a // b)


def _tpu_vmem_limit_bytes():
    """~3/4 of physical per-core VMEM (fallback: 64 MiB physical -> 48 MiB limit)."""
    cap = 64 * 1024 * 1024
    try:
        cap = int(pltpu.get_tpu_info().vmem_capacity_bytes)
    except Exception:
        pass
    return max(32 * 1024 * 1024, (cap // 4) * 3)


def _num_tensorcores():
    """Best-effort TensorCore-per-device count; conservative fallback of 1."""
    try:
        info = pltpu.get_tpu_info()
        for name in ("num_tensorcores", "tensorcore_count", "num_cores", "core_count"):
            v = getattr(info, name, None)
            if v:
                return max(1, min(int(v), 2))
    except Exception:
        pass
    try:
        v = getattr(jax.devices()[0], "num_cores", None)
        if v:
            return max(1, min(int(v), 2))
    except Exception:
        pass
    return 1


def _choose_tile_rows(rows_per_split, D, C, ps_isz, ts_isz, logits_isz, vmem_limit):
    """Biggest batch-tile that fits the VMEM budget (double-buffered inputs + temporaries)."""
    # HBM bytes streamed per row per grid step (ps + ts + logits + act).
    stream_row = D * (ps_isz + ts_isz) + C * logits_isz + 4
    # VMEM bytes per row: double-buffered pipeline inputs, f32 state-path temporaries (diff),
    # a few live f32 logits-path temporaries, two (row, 1) f32 accumulators.
    vmem_row = 2 * stream_row + 4 * D + 3 * 4 * C + 8
    tile_budget = vmem_limit // 2
    tb = tile_budget // max(vmem_row, 1)
    # Mild cap on per-step DMA (~16 MiB) to keep step granularity sane.
    tb = min(tb, (16 * 1024 * 1024) // max(stream_row, 1))
    # TODO(synk): for huge D*C where even 8 rows blow the budget, add a feature-axis grid
    # dimension instead of letting the tile collapse to 8 rows.
    tb = max(8, (tb // 8) * 8)
    need = _round_up(max(rows_per_split, 1), 8)
    return min(tb, need)


def _composite_loss_kernel(ps_ref, ts_ref, logits_ref, act_ref, out_ref,
                           acc_mse, acc_ce, *, batch, tile_rows, tiles_per_split):
    s = pl.program_id(0)        # split (TensorCore shard when core-parallel)
    t = pl.program_id(1)        # sequential batch-tile within the split

    @pl.when(t == 0)
    def _():
        acc_mse[...] = jnp.zeros_like(acc_mse)
        acc_ce[...] = jnp.zeros_like(acc_ce)

    # Logical row offset of this tile (unclamped).  Rows >= batch (over-covered grid and the
    # ragged tail of the last real block) are masked out.  The mask is applied to (tile_rows, 1)
    # row-reduced values, so it is negligible and NaN/Inf-safe (select, not multiply).
    row0 = (s * tiles_per_split + t) * tile_rows
    row_ids = row0 + jax.lax.broadcasted_iota(jnp.int32, (tile_rows, 1), 0)
    valid = row_ids < batch

    # ---- MSE partial: per-row lane reduce into a (tile_rows, 1) f32 accumulator --------------
    diff = ps_ref[...].astype(jnp.float32) - ts_ref[...].astype(jnp.float32)
    row_sq = jnp.sum(diff * diff, axis=-1, keepdims=True)          # (tb, 1), XLU reduce
    acc_mse[...] += jnp.where(valid, row_sq, 0.0)

    # ---- Cross-entropy partial (keepdims layout, no lane<->sublane relayout) ------------------
    logits = logits_ref[...].astype(jnp.float32)                    # (tb, C)
    m = jnp.max(logits, axis=-1, keepdims=True)                     # (tb, 1)
    lse = m + jnp.log(jnp.sum(jnp.exp(logits - m), axis=-1, keepdims=True))
    class_ids = jax.lax.broadcasted_iota(jnp.int32, logits.shape, 1)
    onehot = class_ids == act_ref[...]                              # (tb, C)
    picked = jnp.sum(jnp.where(onehot, logits, 0.0), axis=-1, keepdims=True)
    acc_ce[...] += jnp.where(valid, lse - picked, 0.0)

    # ---- Finalize: single cross-lane reduction per split, lane-aligned (8,128) output slab ----
    @pl.when(t == tiles_per_split - 1)
    def _():
        mse_sum = jnp.sum(acc_mse[...])
        ce_sum = jnp.sum(acc_ce[...])
        rid = jax.lax.broadcasted_iota(jnp.int32, (8, 128), 0)
        lid = jax.lax.broadcasted_iota(jnp.int32, (8, 128), 1)
        slab = jnp.where((rid == 0) & (lid == 0), mse_sum,
                         jnp.where((rid == 0) & (lid == 1), ce_sum, 0.0))
        out_ref[0] = slab


def composite_loss(predicted_state, true_state, predicted_action_logits, true_action,
                   state_weight=1.0, action_weight=1.0):
    """Pallas-backed CompositeLoss.forward. Returns a scalar float32."""
    B = predicted_state.shape[0]
    # Keep native dtypes; the kernel casts to f32 internally (halves HBM traffic for bf16 inputs).
    ps = predicted_state.reshape(B, -1)
    ts = true_state.reshape(B, -1)
    logits = predicted_action_logits.reshape(B, -1)
    act = true_action.reshape(B, 1).astype(jnp.int32)

    D = ps.shape[1]
    C = logits.shape[1]

    vmem_limit = _tpu_vmem_limit_bytes()
    nsplit = _num_tensorcores()

    rows_per_split = _cdiv(B, nsplit)
    tb = _choose_tile_rows(rows_per_split, D, C,
                           ps.dtype.itemsize, ts.dtype.itemsize, logits.dtype.itemsize,
                           vmem_limit)
    tiles_per_split = _cdiv(rows_per_split, tb)

    # No jnp.pad: blocks beyond the last real one are clamped to it (their contribution is masked
    # via the logical-row check inside the kernel); the last real block's ragged tail is padded by
    # the pipeline with undefined values, also masked.
    last_block = max(_cdiv(B, tb) - 1, 0)

    def row_map(s, t):
        return (jnp.minimum(s * tiles_per_split + t, last_block), 0)

    kernel = functools.partial(_composite_loss_kernel, batch=B, tile_rows=tb,
                               tiles_per_split=tiles_per_split)

    if nsplit > 1:
        # Genuine per-TensorCore sharding (v7x); plain "parallel" does not change codegen.
        dim_sem = (getattr(pltpu, "CORE_PARALLEL", "parallel"), "arbitrary")
    else:
        dim_sem = ("arbitrary", "arbitrary")

    partials = pl.pallas_call(
        kernel,
        out_shape=jax.ShapeDtypeStruct((nsplit, 8, 128), jnp.float32),
        grid=(nsplit, tiles_per_split),
        in_specs=[
            pl.BlockSpec((tb, D), row_map),   # predicted_state tile
            pl.BlockSpec((tb, D), row_map),   # true_state tile
            pl.BlockSpec((tb, C), row_map),   # logits tile
            pl.BlockSpec((tb, 1), row_map),   # action indices ride the same batch tiling
        ],
        out_specs=pl.BlockSpec((1, 8, 128), lambda s, t: (s, 0, 0)),
        scratch_shapes=[pltpu.VMEM((tb, 1), jnp.float32),   # MSE per-row accumulator
                        pltpu.VMEM((tb, 1), jnp.float32)],  # CE per-row accumulator
        compiler_params=pltpu.CompilerParams(
            dimension_semantics=dim_sem,
            vmem_limit_bytes=vmem_limit),
    )(ps, ts, logits, act)

    mse_sum = jnp.sum(partials[:, 0, 0])
    ce_sum = jnp.sum(partials[:, 0, 1])
    # Mean denominators and the loss weights applied exactly once, after combining splits.
    return (jnp.float32(state_weight) * mse_sum / jnp.float32(B * D)
            + jnp.float32(action_weight) * ce_sum / jnp.float32(B))


def _reference(ps, ts, logits, act, sw, aw):
    mse = jnp.mean((ps - ts) ** 2)
    logp = jax.nn.log_softmax(logits, axis=-1)
    ce = -jnp.mean(jnp.take_along_axis(logp, act[:, None], axis=-1)[:, 0])
    return sw * mse + aw * ce


if __name__ == "__main__":
    key = jax.random.PRNGKey(0)
    k1, k2, k3, k4 = jax.random.split(key, 4)

    B, D_STATE, N_ACTIONS = 8, 32, 16
    predicted_state = jax.random.normal(k1, (B, D_STATE), dtype=jnp.float32)
    true_state = jax.random.normal(k2, (B, D_STATE), dtype=jnp.float32)
    predicted_action_logits = jax.random.normal(k3, (B, N_ACTIONS), dtype=jnp.float32)
    true_action = jax.random.randint(k4, (B,), 0, N_ACTIONS, dtype=jnp.int32)

    loss = composite_loss(predicted_state, true_state,
                          predicted_action_logits, true_action,
                          state_weight=1.0, action_weight=1.0)
    loss = jax.block_until_ready(loss)

    ref = _reference(predicted_state, true_state, predicted_action_logits,
                     true_action, 1.0, 1.0)
    assert jnp.allclose(loss, ref, rtol=1e-5, atol=1e-5), (loss, ref)

    print("KERNEL_OK")
</pallas_src>

<mosaic_0001>
module attributes {stable_mosaic.version = 11 : i64} {
  func.func @_composite_loss_kernel(%arg0: i32, %arg1: i32, %arg2: memref<8x32xf32, #tpu.memory_space<vmem>>, %arg3: memref<8x32xf32, #tpu.memory_space<vmem>>, %arg4: memref<8x16xf32, #tpu.memory_space<vmem>>, %arg5: memref<8x1xi32, #tpu.memory_space<vmem>>, %arg6: memref<1x8x128xf32, #tpu.memory_space<vmem>>, %arg7: memref<8x1xf32, #tpu.memory_space<vmem>>, %arg8: memref<8x1xf32, #tpu.memory_space<vmem>>) attributes {dimension_semantics = [#tpu.dimension_semantics<arbitrary>, #tpu.dimension_semantics<arbitrary>], iteration_bounds = array<i64: 1, 1>, scalar_prefetch = 0 : i64, scratch_operands = 2 : i64, tpu.core_type = #tpu.core_type<tc>, window_params = [{transform_indices = @transform_0, window_bounds = array<i64: 8, 32>}, {transform_indices = @transform_1, window_bounds = array<i64: 8, 32>}, {transform_indices = @transform_2, window_bounds = array<i64: 8, 16>}, {transform_indices = @transform_3, window_bounds = array<i64: 8, 1>}, {transform_indices = @transform_4, window_bounds = array<i64: 1, 8, 128>}]} {
    %c0_i32 = arith.constant 0 : i32
    %0 = arith.cmpi eq, %arg1, %c0_i32 : i32
    %1 = arith.extui %0 : i1 to i32
    %c0_i32_0 = arith.constant 0 : i32
    %2 = arith.cmpi ne, %1, %c0_i32_0 : i32
    scf.if %2 {
      %cst_25 = arith.constant 0.000000e+00 : f32
      %49 = vector.broadcast %cst_25 : f32 to vector<8x1xf32>
      %c0_26 = arith.constant 0 : index
      %c0_27 = arith.constant 0 : index
      %50 = vector.load %arg7[%c0_26, %c0_27] : memref<8x1xf32, #tpu.memory_space<vmem>>, vector<8x1xf32>
      tpu.vector_store %arg7[%c0_26, %c0_27], %49 {strides = array<i32>} : memref<8x1xf32, #tpu.memory_space<vmem>>, vector<8x1xf32>,
      %cst_28 = arith.constant 0.000000e+00 : f32
      %51 = vector.broadcast %cst_28 : f32 to vector<8x1xf32>
      %c0_29 = arith.constant 0 : index
      %c0_30 = arith.constant 0 : index
      %52 = vector.load %arg8[%c0_29, %c0_30] : memref<8x1xf32, #tpu.memory_space<vmem>>, vector<8x1xf32>
      tpu.vector_store %arg8[%c0_29, %c0_30], %51 {strides = array<i32>} : memref<8x1xf32, #tpu.memory_space<vmem>>, vector<8x1xf32>,
    } else {
    }
    %c1_i32 = arith.constant 1 : i32
    %3 = arith.muli %arg0, %c1_i32 : i32
    %4 = arith.addi %3, %arg1 : i32
    %c8_i32 = arith.constant 8 : i32
    %5 = arith.muli %4, %c8_i32 : i32
    %6 = tpu.iota {dimensions = array<i32: 0>} : vector<8x1xi32>
    %7 = vector.broadcast %5 : i32 to vector<8x1xi32>
    %8 = arith.addi %7, %6 : vector<8x1xi32>
    %c8_i32_1 = arith.constant 8 : i32
    %9 = vector.broadcast %c8_i32_1 : i32 to vector<8x1xi32>
    %10 = arith.cmpi slt, %8, %9 : vector<8x1xi32>
    %c0 = arith.constant 0 : index
    %c0_2 = arith.constant 0 : index
    %11 = vector.load %arg2[%c0, %c0_2] : memref<8x32xf32, #tpu.memory_space<vmem>>, vector<8x32xf32>
    %c0_3 = arith.constant 0 : index
    %c0_4 = arith.constant 0 : index
    %12 = vector.load %arg3[%c0_3, %c0_4] : memref<8x32xf32, #tpu.memory_space<vmem>>, vector<8x32xf32>
    %13 = arith.subf %11, %12 : vector<8x32xf32>
    %14 = arith.mulf %13, %13 : vector<8x32xf32>
    %cst = arith.constant dense<0.000000e+00> : vector<8xf32>
    %15 = vector.multi_reduction <add>, %14, %cst [1] : vector<8x32xf32> to vector<8xf32>
    %16 = vector.shape_cast %15 : vector<8xf32> to vector<8x1xf32>
    %c0_5 = arith.constant 0 : index
    %c0_6 = arith.constant 0 : index
    %17 = vector.load %arg7[%c0_5, %c0_6] : memref<8x1xf32, #tpu.memory_space<vmem>>, vector<8x1xf32>
    %cst_7 = arith.constant 0.000000e+00 : f32
    %18 = vector.broadcast %cst_7 : f32 to vector<8x1xf32>
    %19 = arith.select %10, %16, %18 : vector<8x1xi1>, vector<8x1xf32>
    %20 = arith.addf %17, %19 : vector<8x1xf32>
    %c0_8 = arith.constant 0 : index
    %c0_9 = arith.constant 0 : index
    %21 = vector.load %arg7[%c0_8, %c0_9] : memref<8x1xf32, #tpu.memory_space<vmem>>, vector<8x1xf32>
    tpu.vector_store %arg7[%c0_8, %c0_9], %20 {strides = array<i32>} : memref<8x1xf32, #tpu.memory_space<vmem>>, vector<8x1xf32>,
    %c0_10 = arith.constant 0 : index
    %c0_11 = arith.constant 0 : index
    %22 = vector.load %arg4[%c0_10, %c0_11] : memref<8x16xf32, #tpu.memory_space<vmem>>, vector<8x16xf32>
    %cst_12 = arith.constant dense<0xFF800000> : vector<8xf32>
    %23 = vector.multi_reduction <maximumf>, %22, %cst_12 [1] : vector<8x16xf32> to vector<8xf32>
    %24 = vector.shape_cast %23 : vector<8xf32> to vector<8x1xf32>
    %25 = vector.broadcast %24 : vector<8x1xf32> to vector<8x16xf32>
    %26 = arith.subf %22, %25 : vector<8x16xf32>
    %27 = math.exp %26 : vector<8x16xf32>
    %cst_13 = arith.constant dense<0.000000e+00> : vector<8xf32>
    %28 = vector.multi_reduction <add>, %27, %cst_13 [1] : vector<8x16xf32> to vector<8xf32>
    %29 = vector.shape_cast %28 : vector<8xf32> to vector<8x1xf32>
    %30 = math.log %29 : vector<8x1xf32>
    %31 = arith.addf %24, %30 : vector<8x1xf32>
    %32 = tpu.iota {dimensions = array<i32: 1>} : vector<8x16xi32>
    %c0_14 = arith.constant 0 : index
    %c0_15 = arith.constant 0 : index
    %33 = vector.load %arg5[%c0_14, %c0_15] : memref<8x1xi32, #tpu.memory_space<vmem>>, vector<8x1xi32>
    %34 = vector.broadcast %33 : vector<8x1xi32> to vector<8x16xi32>
    %35 = arith.cmpi eq, %32, %34 : vector<8x16xi32>
    %cst_16 = arith.constant 0.000000e+00 : f32
    %36 = vector.broadcast %cst_16 : f32 to vector<8x16xf32>
    %37 = arith.select %35, %22, %36 : vector<8x16xi1>, vector<8x16xf32>
    %cst_17 = arith.constant dense<0.000000e+00> : vector<8xf32>
    %38 = vector.multi_reduction <add>, %37, %cst_17 [1] : vector<8x16xf32> to vector<8xf32>
    %39 = vector.shape_cast %38 : vector<8xf32> to vector<8x1xf32>
    %c0_18 = arith.constant 0 : index
    %c0_19 = arith.constant 0 : index
    %40 = vector.load %arg8[%c0_18, %c0_19] : memref<8x1xf32, #tpu.memory_space<vmem>>, vector<8x1xf32>
    %41 = arith.subf %31, %39 : vector<8x1xf32>
    %cst_20 = arith.constant 0.000000e+00 : f32
    %42 = vector.broadcast %cst_20 : f32 to vector<8x1xf32>
    %43 = arith.select %10, %41, %42 : vector<8x1xi1>, vector<8x1xf32>
    %44 = arith.addf %40, %43 : vector<8x1xf32>
    %c0_21 = arith.constant 0 : index
    %c0_22 = arith.constant 0 : index
    %45 = vector.load %arg8[%c0_21, %c0_22] : memref<8x1xf32, #tpu.memory_space<vmem>>, vector<8x1xf32>
    tpu.vector_store %arg8[%c0_21, %c0_22], %44 {strides = array<i32>} : memref<8x1xf32, #tpu.memory_space<vmem>>, vector<8x1xf32>,
    %c0_i32_23 = arith.constant 0 : i32
    %46 = arith.cmpi eq, %arg1, %c0_i32_23 : i32
    %47 = arith.extui %46 : i1 to i32
    %c0_i32_24 = arith.constant 0 : i32
    %48 = arith.cmpi ne, %47, %c0_i32_24 : i32
    scf.if %48 {
      %c0_25 = arith.constant 0 : index
      %c0_26 = arith.constant 0 : index
      %49 = vector.load %arg7[%c0_25, %c0_26] : memref<8x1xf32, #tpu.memory_space<vmem>>, vector<8x1xf32>
      %50 = vector.shape_cast %49 : vector<8x1xf32> to vector<1x8x1xf32>
      %cst_27 = arith.constant dense<0.000000e+00> : vector<1xf32>
      %51 = vector.multi_reduction <add>, %50, %cst_27 [1, 2] : vector<1x8x1xf32> to vector<1xf32>
      %52 = vector.shape_cast %51 : vector<1xf32> to vector<1x1x1xf32>
      %53 = vector.extract %52[0, 0, 0] : f32 from vector<1x1x1xf32>
      %c0_28 = arith.constant 0 : index
      %c0_29 = arith.constant 0 : index
      %54 = vector.load %arg8[%c0_28, %c0_29] : memref<8x1xf32, #tpu.memory_space<vmem>>, vector<8x1xf32>
      %55 = vector.shape_cast %54 : vector<8x1xf32> to vector<1x8x1xf32>
      %cst_30 = arith.constant dense<0.000000e+00> : vector<1xf32>
      %56 = vector.multi_reduction <add>, %55, %cst_30 [1, 2] : vector<1x8x1xf32> to vector<1xf32>
      %57 = vector.shape_cast %56 : vector<1xf32> to vector<1x1x1xf32>
      %58 = vector.extract %57[0, 0, 0] : f32 from vector<1x1x1xf32>
      %59 = tpu.iota {dimensions = array<i32: 0>} : vector<8x128xi32>
      %60 = tpu.iota {dimensions = array<i32: 1>} : vector<8x128xi32>
      %c0_i32_31 = arith.constant 0 : i32
      %61 = vector.broadcast %c0_i32_31 : i32 to vector<8x128xi32>
      %62 = arith.cmpi eq, %59, %61 : vector<8x128xi32>
      %c0_i32_32 = arith.constant 0 : i32
      %63 = vector.broadcast %c0_i32_32 : i32 to vector<8x128xi32>
      %64 = arith.cmpi eq, %60, %63 : vector<8x128xi32>
      %65 = arith.andi %62, %64 : vector<8x128xi1>
      %c0_i32_33 = arith.constant 0 : i32
      %66 = vector.broadcast %c0_i32_33 : i32 to vector<8x128xi32>
      %67 = arith.cmpi eq, %59, %66 : vector<8x128xi32>
      %c1_i32_34 = arith.constant 1 : i32
      %68 = vector.broadcast %c1_i32_34 : i32 to vector<8x128xi32>
      %69 = arith.cmpi eq, %60, %68 : vector<8x128xi32>
      %70 = arith.andi %67, %69 : vector<8x128xi1>
      %cst_35 = arith.constant 0.000000e+00 : f32
      %71 = vector.broadcast %58 : f32 to vector<8x128xf32>
      %72 = vector.broadcast %cst_35 : f32 to vector<8x128xf32>
      %73 = arith.select %70, %71, %72 : vector<8x128xi1>, vector<8x128xf32>
      %74 = vector.broadcast %53 : f32 to vector<8x128xf32>
      %75 = arith.select %65, %74, %73 : vector<8x128xi1>, vector<8x128xf32>
      %c0_36 = arith.constant 0 : index
      %c0_37 = arith.constant 0 : index
      %c0_38 = arith.constant 0 : index
      %76 = vector.load %arg6[%c0_36, %c0_37, %c0_38] : memref<1x8x128xf32, #tpu.memory_space<vmem>>, vector<1x8x128xf32>
      %77 = vector.shape_cast %76 : vector<1x8x128xf32> to vector<8x128xf32>
      %78 = vector.shape_cast %75 : vector<8x128xf32> to vector<1x8x128xf32>
      tpu.vector_store %arg6[%c0_36, %c0_37, %c0_38], %78 {strides = array<i32>} : memref<1x8x128xf32, #tpu.memory_space<vmem>>, vector<1x8x128xf32>,
    } else {
    }
    return
  }
  func.func @transform_0(%arg0: i32, %arg1: i32) -> (i32, i32) {
    %c1_i32 = arith.constant 1 : i32
    %0 = arith.muli %arg0, %c1_i32 : i32
    %1 = arith.addi %0, %arg1 : i32
    %c0_i32 = arith.constant 0 : i32
    %2 = arith.minsi %1, %c0_i32 : i32
    %c0_i32_0 = arith.constant 0 : i32
    %c0_i32_1 = arith.constant 0 : i32
    return %2, %c0_i32_0 : i32, i32
  }
  func.func @transform_1(%arg0: i32, %arg1: i32) -> (i32, i32) {
    %c1_i32 = arith.constant 1 : i32
    %0 = arith.muli %arg0, %c1_i32 : i32
    %1 = arith.addi %0, %arg1 : i32
    %c0_i32 = arith.constant 0 : i32
    %2 = arith.minsi %1, %c0_i32 : i32
    %c0_i32_0 = arith.constant 0 : i32
    %c0_i32_1 = arith.constant 0 : i32
    return %2, %c0_i32_0 : i32, i32
  }
  func.func @transform_2(%arg0: i32, %arg1: i32) -> (i32, i32) {
    %c1_i32 = arith.constant 1 : i32
    %0 = arith.muli %arg0, %c1_i32 : i32
    %1 = arith.addi %0, %arg1 : i32
    %c0_i32 = arith.constant 0 : i32
    %2 = arith.minsi %1, %c0_i32 : i32
    %c0_i32_0 = arith.constant 0 : i32
    %c0_i32_1 = arith.constant 0 : i32
    return %2, %c0_i32_0 : i32, i32
  }
  func.func @transform_3(%arg0: i32, %arg1: i32) -> (i32, i32) {
    %c1_i32 = arith.constant 1 : i32
    %0 = arith.muli %arg0, %c1_i32 : i32
    %1 = arith.addi %0, %arg1 : i32
    %c0_i32 = arith.constant 0 : i32
    %2 = arith.minsi %1, %c0_i32 : i32
    %c0_i32_0 = arith.constant 0 : i32
    %c0_i32_1 = arith.constant 0 : i32
    return %2, %c0_i32_0 : i32, i32
  }
  func.func @transform_4(%arg0: i32, %arg1: i32) -> (i32, i32, i32) {
    %c0_i32 = arith.constant 0 : i32
    %c0_i32_0 = arith.constant 0 : i32
    %c0_i32_1 = arith.constant 0 : i32
    return %arg0, %c0_i32, %c0_i32_0 : i32, i32, i32
  }
}

</mosaic_0001>

<llo_original>
// kernel: tpu_custom_call.1
$region0: #{tpu_custom_call.1}
  #allocation0 [shape = 'u32[]', space=smem, size = 0x4, offset = 0x4, fixed_abs, tag = 'smem constant byte address 0x4 - core index']
  #allocation1 [shape = 'u32[144,128]{1,0:T(1,128)}', space=vmem, size = 0x12000, scoped, tag = 'internal scratch']
  #allocation2 [shape = 'f32[8,1]{1,0:T(8,128)}', space=vmem, size = 0x1000, scoped, tag = 'scratch operand']
  #allocation3 [shape = 'f32[8,1]{1,0:T(8,128)}', space=vmem, size = 0x1000, scoped, tag = 'scratch operand']
  %s0 = inlined_call_operand.vmem [shape: f32[8,32], index: 0, kind: input, shape index: {}]
  %s1 = inlined_call_operand.hbm [shape: f32[8,32], index: 1, kind: input, shape index: {}]
  %s2 = inlined_call_operand.hbm [shape: f32[8,16], index: 2, kind: input, shape index: {}]
  %s3 = inlined_call_operand.vmem [shape: s32[8,1], index: 3, kind: input, shape index: {}]
  %s4 = inlined_call_operand.hbm [shape: f32[1,8,128], index: 4, kind: output, shape index: {}]
  %s5 = sld [smem:[#allocation0]]
  $region42: #{tpu_custom_call.1} parent=0
    _
  %s7 = ssub.s32 1, %s5
  %s8 = scalar_select 0, %s7, %s5
  $region1: #{tpu_custom_call.1} parent=0
    #allocation4 [shape = 'u8[4096]{0}', space=vmem, size = 0x1000, scoped, tag = 'input window, operand 1, single buffered']
    #allocation5 [shape = 's32[1]{0}', space=sflag, size = 0x4, scoped, tag = 'scoped memory for tpu_custom_call.1']
    #allocation6 [shape = 's32[1]{0}', space=sflag, size = 0x4, scoped, tag = 'scoped memory for tpu_custom_call.1']
    #allocation7 [shape = 'u8[4096]{0}', space=vmem, size = 0x1000, scoped, tag = 'input window, operand 2, single buffered']
    #allocation8 [shape = 's32[1]{0}', space=sflag, size = 0x4, scoped, tag = 'scoped memory for tpu_custom_call.1']
    #allocation9 [shape = 'u8[4096]{0}', space=vmem, size = 0x1000, scoped, tag = 'output window, operand 0, single buffered']
    %9 = vsyncpa [#allocation5], 0
    %10 = vsyncpa [#allocation8], 0
    %11 = vsyncpa [#allocation6], 0
    // Predicated region
    $region2: #{tpu_custom_call.1} parent=1 // pred_check
      _
    $region3: #{tpu_custom_call.1} parent=1 // pred_check_branch
      %13 = sbr.rel (0) target = $region5
    $region4: #{tpu_custom_call.1} parent=1 // pred_region
      %s14 = sadd.s32 0, 0
      %p15 = scmp.lt.s32.totalorder %s14, 0
      %s16 = scalar_select %p15, %s14, 0
      %p17 = scmp.lt.s32.totalorder %s16, 0
      %s18 = scalar_select %p17, %s16, 0
      %s19 = smul.addr %s18, 8
      %s20 = scalar_lea.vmem %s0, %s19
      %s21 = sadd.s32 0, 0
      %p22 = scmp.lt.s32.totalorder %s21, 0
      %s23 = scalar_select %p22, %s21, 0
    $region5: #{tpu_custom_call.1} parent=1 // pred_fallthru
      _
    // Predicated region
    $region6: #{tpu_custom_call.1} parent=1 // pred_check
      _
    $region7: #{tpu_custom_call.1} parent=1 // pred_check_branch
      %25 = sbr.rel (0) target = $region9
    $region8: #{tpu_custom_call.1} parent=1 // pred_region
      %s26 = sadd.s32 0, 0
      %p27 = scmp.lt.s32.totalorder %s26, 0
      %s28 = scalar_select %p27, %s26, 0
      %s30 = ssub.s32 128, 128
      %31 = vsyncadd [#allocation5], %s30
      %s32 = smul.addr %s28, 128
      %s33 = scalar_lea.hbm %s1, %s32
      %s35 = sshll.u32 [#allocation4], 4
      %s36 = int_to_ptr.vmem [resolvable:$true] %s35
      %38 = dma.hbm_to_vmem [thread:$0]  %s33, 128, %s36, [#allocation5]
    $region9: #{tpu_custom_call.1} parent=1 // pred_fallthru
      _
    // Predicated region
    $region10: #{tpu_custom_call.1} parent=1 // pred_check
      _
    $region11: #{tpu_custom_call.1} parent=1 // pred_check_branch
      %40 = sbr.rel (0) target = $region13
    $region12: #{tpu_custom_call.1} parent=1 // pred_region
      %s41 = sadd.s32 0, 0
      %p42 = scmp.lt.s32.totalorder %s41, 0
      %s43 = scalar_select %p42, %s41, 0
      %s45 = ssub.s32 128, 128
      %46 = vsyncadd [#allocation8], %s45
      %s47 = smul.addr %s43, 128
      %s48 = scalar_lea.hbm %s2, %s47
      %s50 = sshll.u32 [#allocation7], 4
      %s51 = int_to_ptr.vmem [resolvable:$true] %s50
      %53 = dma.hbm_to_vmem [thread:$0]  %s48, 128, %s51, [#allocation8]
    $region13: #{tpu_custom_call.1} parent=1 // pred_fallthru
      _
    // Predicated region
    $region14: #{tpu_custom_call.1} parent=1 // pred_check
      _
    $region15: #{tpu_custom_call.1} parent=1 // pred_check_branch
      %55 = sbr.rel (0) target = $region17
    $region16: #{tpu_custom_call.1} parent=1 // pred_region
      %s56 = sadd.s32 0, 0
      %p57 = scmp.lt.s32.totalorder %s56, 0
      %s58 = scalar_select %p57, %s56, 0
      %p59 = scmp.lt.s32.totalorder %s58, 0
      %s60 = scalar_select %p59, %s58, 0
      %s61 = smul.addr %s60, 8
      %s62 = scalar_lea.vmem %s3, %s61
      %s63 = sadd.s32 0, 0
      %p64 = scmp.lt.s32.totalorder %s63, 0
      %s65 = scalar_select %p64, %s63, 0
    $region17: #{tpu_custom_call.1} parent=1 // pred_fallthru
      _
    // Predicated region
    $region18: #{tpu_custom_call.1} parent=1 // pred_check
      _
    $region19: #{tpu_custom_call.1} parent=1 // pred_check_branch
      %67 = sbr.rel (0) target = $region21
    $region20: #{tpu_custom_call.1} parent=1 // pred_region
      %68 = dma.done [#allocation5], 128
    $region21: #{tpu_custom_call.1} parent=1 // pred_fallthru
      _
    // Predicated region
    $region22: #{tpu_custom_call.1} parent=1 // pred_check
      _
    $region23: #{tpu_custom_call.1} parent=1 // pred_check_branch
      %70 = sbr.rel (0) target = $region25
    $region24: #{tpu_custom_call.1} parent=1 // pred_region
      %71 = dma.done [#allocation8], 128
    $region25: #{tpu_custom_call.1} parent=1 // pred_fallthru
      _
    %s72 = sadd.s32 0, 0
    %p73 = scmp.lt.s32.totalorder %s72, 0
    %s74 = scalar_select %p73, %s72, 0
    %p75 = scmp.lt.s32.totalorder %s74, 0
    %s76 = scalar_select %p75, %s74, 0
    %s77 = smul.addr %s76, 8
    %s78 = scalar_lea.vmem %s0, %s77
    %s79 = sadd.s32 0, 0
    %p80 = scmp.lt.s32.totalorder %s79, 0
    %s81 = scalar_select %p80, %s79, 0
    %p82 = scmp.lt.s32.totalorder %s81, 0
    %s83 = scalar_select %p82, %s81, 0
    %s84 = smul.addr %s83, 8
    %s85 = scalar_lea.vmem %s3, %s84
    %s86 = sadd.s32 0, 0
    %p87 = scmp.lt.s32.totalorder %s86, 0
    %s88 = scalar_select %p87, %s86, 0
    %p89 = scmp.lt.s32.totalorder %s88, 0
    %s90 = scalar_select %p89, %s88, 0
    %s91 = smul.addr %s90, 8
    %s92 = scalar_lea.vmem %s0, %s91
    %s93 = sadd.s32 0, 0
    %p94 = scmp.lt.s32.totalorder %s93, 0
    %s95 = scalar_select %p94, %s93, 0
    %s96 = sadd.s32 0, 0
    %p97 = scmp.lt.s32.totalorder %s96, 0
    %s98 = scalar_select %p97, %s96, 0
    %s99 = sadd.s32 0, 0
    %p100 = scmp.lt.s32.totalorder %s99, 0
    %s101 = scalar_select %p100, %s99, 0
    %s102 = sadd.s32 0, 0
    %p103 = scmp.lt.s32.totalorder %s102, 0
    %s104 = scalar_select %p103, %s102, 0
    %p105 = scmp.lt.s32.totalorder %s104, 0
    %s106 = scalar_select %p105, %s104, 0
    %s107 = smul.addr %s106, 8
    %s108 = scalar_lea.vmem %s3, %s107
    %s109 = sadd.s32 0, 0
    %p110 = scmp.lt.s32.totalorder %s109, 0
    %s111 = scalar_select %p110, %s109, 0
    %p112 = scmp.eq.s32.totalorder 0, 0
    // Predicated region
    $region26: #{tpu_custom_call.1} parent=1 // pred_check
      %p113 = pneg %p112
    $region27: #{tpu_custom_call.1} parent=1 // pred_check_branch
      %115 = sbr.rel (%p113) target = $region29
    $region28: #{tpu_custom_call.1} parent=1 // pred_region
      %vm116 = vcmask 7168
      %117 = vst.msk [vmem:[#allocation2] sm:$0xff] %vm116, 0.0
      %118 = vst.msk [vmem:[#allocation3] sm:$0xff] %vm116, 0.0
    $region29: #{tpu_custom_call.1} parent=1 // pred_fallthru
      _
    %s119 = sadd.s32 0, 0
    %s120 = smul.u32 %s119, 8
    %v121 = vlaneseq
    %v122 = vshrl.u32 %v121, 7
    %v123 = vstv %s120
    %v124 = vadd.s32 %v123, %v122
    %vm125 = vcmp.lt.s32.totalorder %v124, 8
    %v126 = vld [vmem:[%s92] sm:$0xff]
    %v127 = vld [vmem:[#allocation4] sm:$0xff]
    %v128 = vsub.f32 %v126, %v127
    %v129 = vmul.f32 %v128, %v128
    %vm130 = vcmask 261120
    %v131 = vsel %vm130, %v129, 0.0
    %132 = vadd.xlane.f32.xlu0 %v131
    %v133 = vpop.xlane.xlu0 %132
    %v134 = vld [vmem:[#allocation2] sm:$0xff]
    %v135 = vsel %vm125, %v133, 0.0
    %v136 = vadd.f32 %v134, %v135
    %vm137 = vcmask 7168
    %138 = vst.msk [vmem:[#allocation2] sm:$0xff] %vm137, %v136
    %v139 = vld [vmem:[#allocation7] sm:$0xff]
    %vm140 = vcmask 130048
    %v141 = vsel %vm140, %v139, -inf
    %142 = vmax.xlane.f32.xlu0 %v141
    %v143 = vpop.xlane.xlu0 %142
    %v144 = vsub.f32 %v139, %v143
    %v145 = vmul.f32 %v144, 1.442695
    %v146 = vpow.pop %v145
    %v147 = vsel %vm140, %v146, 0.0
    %148 = vadd.xlane.f32.xlu0 %v147
    %v149 = vpop.xlane.xlu0 %148
    %v150 = vlog2.pop %v149
    %v151 = vmul.f32 %v150, 0.6931472
    %v152 = vadd.f32 %v143, %v151
    %v153 = vlaneseq
    %v154 = vand.u32 %v153, 127
    %v155 = vld [vmem:[%s108] sm:$0xff]
    %156 = vset.pattern.permute.xlu0 0
    %157 = vperm.xlu0 %156, %v155
    %v158 = vpop.permute.xlu0 %157
    %vm159 = vcmp.eq.s32.totalorder %v154, %v158
    %v160 = vsel %vm159, %v139, 0.0
    %v161 = vsel %vm140, %v160, 0.0
    %162 = vadd.xlane.f32.xlu0 %v161
    %v163 = vpop.xlane.xlu0 %162
    %v164 = vld [vmem:[#allocation3] sm:$0xff]
    %v165 = vsub.f32 %v152, %v163
    %v166 = vsel %vm125, %v165, 0.0
    %v167 = vadd.f32 %v164, %v166
    %168 = vst.msk [vmem:[#allocation3] sm:$0xff] %vm137, %v167
    // Predicated region
    $region30: #{tpu_custom_call.1} parent=1 // pred_check
      %p169 = pneg %p112
    $region31: #{tpu_custom_call.1} parent=1 // pred_check_branch
      %171 = sbr.rel (%p169) target = $region33
    $region32: #{tpu_custom_call.1} parent=1 // pred_region
      %v172 = vld [vmem:[#allocation2] sm:$0xff]
      %v173 = vsel %vm137, %v172, 0.0
      %174 = vadd.xlane.f32.xlu0 %v173
      %v175 = vpop.xlane.xlu0 %174
      %v176 = vrot.slane %v175, 4
      %v177 = vadd.f32 %v175, %v176
      %v178 = vrot.slane %v177, 2
      %v179 = vadd.f32 %v177, %v178
      %v180 = vrot.slane %v179, 1
      %v181 = vadd.f32 %v179, %v180
      %s182 = vtos %v181
      %v183 = vld [vmem:[#allocation3] sm:$0xff]
      %v184 = vsel %vm137, %v183, 0.0
      %185 = vadd.xlane.f32.xlu0 %v184
      %v186 = vpop.xlane.xlu0 %185
      %v187 = vrot.slane %v186, 4
      %v188 = vadd.f32 %v186, %v187
      %v189 = vrot.slane %v188, 2
      %v190 = vadd.f32 %v188, %v189
      %v191 = vrot.slane %v190, 1
      %v192 = vadd.f32 %v190, %v191
      %s193 = vtos %v192
      %vm194 = vcmp.eq.s32.totalorder %v122, 0
      %vm195 = vcmp.eq.s32.totalorder %v154, 0
      %vm196 = vmand %vm194, %vm195
      %vm197 = vcmp.eq.s32.totalorder %v154, 1
      %vm198 = vmand %vm194, %vm197
      %v199 = vstv %s193
      %v200 = vsel %vm198, %v199, 0.0
      %v201 = vstv %s182
      %v202 = vsel %vm196, %v201, %v200
      %203 = vst [vmem:[#allocation9] sm:$0xff] %v202
    $region33: #{tpu_custom_call.1} parent=1 // pred_fallthru
      _
    // Predicated region
    $region34: #{tpu_custom_call.1} parent=1 // pred_check
      _
    $region35: #{tpu_custom_call.1} parent=1 // pred_check_branch
      %205 = sbr.rel (0) target = $region37
    $region36: #{tpu_custom_call.1} parent=1 // pred_region
      %s207 = ssub.s32 128, 128
      %208 = vsyncadd [#allocation6], %s207
      %s210 = sshll.u32 [#allocation9], 4
      %s211 = int_to_ptr.vmem [resolvable:$true] %s210
      %213 = dma.vmem_to_hbm [thread:$0]  %s211, 128, %s4, [#allocation6]
    $region37: #{tpu_custom_call.1} parent=1 // pred_fallthru
      _
    // Predicated region
    $region38: #{tpu_custom_call.1} parent=1 // pred_check
      _
    $region39: #{tpu_custom_call.1} parent=1 // pred_check_branch
      %215 = sbr.rel (0) target = $region41
    $region40: #{tpu_custom_call.1} parent=1 // pred_region
      %216 = dma.done [#allocation6], 128
    $region41: #{tpu_custom_call.1} parent=1 // pred_fallthru
      _
    %217 = vsyncpa [#allocation5], 1
    %218 = vsyncpa [#allocation8], 1
    %219 = vsyncpa [#allocation6], 1

</llo_original>
